<compile_context>
chip_gen: v5e
topology: v5e:2x2
jax: 0.10.0
libtpu: 0.0.40
codegen_flags: <defaults>
</compile_context>

<pallas_src>
import functools

import jax
import jax.numpy as jnp
import numpy as np
from jax.experimental import pallas as pl
from jax.experimental.pallas import tpu as pltpu

# contract the last dim of both operands: [1, H] x [TB, H] -> [1, TB]
_NT_DIM_NUMBERS = (((1,), (1,)), ((), ()))


def _round_up(x, m):
    return ((x + m - 1) // m) * m


def _estimator_kernel(xs_ref, w1_ref, b1t_ref, w2_ref, b2_ref, c_ref,
                      dxs_ref, neg_div_ref, *, matmul_dtype, lane_dense_div):
    x = xs_ref[...]                     # [TB, D]   f32, streamed per grid step
    w1 = w1_ref[...]                    # [D, Hp]   matmul dtype (pre-cast), resident
    w2 = w2_ref[...]                    # [Hp, D]   matmul dtype (pre-cast), resident
    b1t = b1t_ref[...]                  # [1, Hp]   f32, t already folded in
    b2 = b2_ref[...]                    # [1, D]    f32
    c = c_ref[...]                      # [1, Hp]   f32 = diag(W2 @ W1), hoisted

    # dynamics forward: dxs = tanh(x W1 + b1 + t) W2 + b2   (f32 accumulation)
    h = jnp.dot(x.astype(matmul_dtype), w1,
                preferred_element_type=jnp.float32) + b1t            # [TB, Hp]
    a = jnp.tanh(h)                                                  # [TB, Hp] (EUP)
    dxs = jnp.dot(a.astype(matmul_dtype), w2,
                  preferred_element_type=jnp.float32) + b2           # [TB, D]
    dxs_ref[...] = dxs.astype(dxs_ref.dtype)

    # exact Jacobian trace: trace(J_b) = sum_k (1 - a_{b,k}^2) * c_k
    d = 1.0 - a * a                                                  # [TB, Hp] f32
    if lane_dense_div:
        # [1,Hp] x [TB,Hp]^T -> [1,TB]: MXU does the reduction, store is lane-dense.
        div = jax.lax.dot_general(c, d, _NT_DIM_NUMBERS,
                                  preferred_element_type=jnp.float32)
        neg_div_ref[...] = (-div).astype(neg_div_ref.dtype)
    else:
        div = jnp.sum(d * c, axis=-1, keepdims=True)                 # [TB, 1]
        neg_div_ref[...] = (-div).astype(neg_div_ref.dtype)


def brute_force_estimator(t, xs, w1, b1, w2, b2, *,
                          block_batch=512, use_bf16_matmul=True):
    """Returns (dxs [B, D], -divergence [B, 1]).

    With use_bf16_matmul=True the MXU operands are bf16 (f32 accumulation); dxs and
    the divergence then carry ~1e-3 relative error vs pure f32.
    """
    B, D = xs.shape
    H = w1.shape[1]
    out_dtype = xs.dtype
    f32 = jnp.float32

    matmul_dtype = jnp.bfloat16 if use_bf16_matmul else f32
    mm_bytes = jnp.dtype(matmul_dtype).itemsize

    # --- batch-invariant prep, hoisted out of the kernel (runs once per call) ---
    b1 = jnp.reshape(b1, (1, H)).astype(f32)
    b2 = jnp.reshape(b2, (1, D)).astype(f32)
    b1t = b1 + jnp.reshape(jnp.asarray(t, dtype=f32), (1, 1))     # fold t into bias
    c = jnp.sum(w1.astype(f32) * w2.astype(f32).T,                # diag(W2 @ W1)
                axis=0, keepdims=True)                            # [1, H]

    # Pad hidden dim to a 128-lane multiple (no extra HBM streaming: resident blocks).
    Hp = _round_up(H, 128)
    if Hp != H:
        w1 = jnp.pad(w1, ((0, 0), (0, Hp - H)))
        w2 = jnp.pad(w2, ((0, Hp - H), (0, 0)))
        b1t = jnp.pad(b1t, ((0, 0), (0, Hp - H)))
        c = jnp.pad(c, ((0, 0), (0, Hp - H)))
    # Pre-cast once in the wrapper: no per-step casts of resident weight blocks.
    w1 = w1.astype(matmul_dtype)
    w2 = w2.astype(matmul_dtype)

    # --- batch tile: >=2 grid steps, sublane aligned, capped by a VMEM budget ---
    SUB = 8                                                        # f32 sublane multiple
    resident = 2 * mm_bytes * 2 * D * Hp + 4 * (3 * Hp + 2 * D)    # weights (2 bufs) + vecs
    per_row = 4 * (2 * D + 2 * D + 2) + 4 * (3 * Hp + D)           # xs/dxs dbl-buf + f32 temps
    budget = 40 << 20                                              # fits v7x's 64 MiB VMEM
    tb_cap = max(SUB, ((budget - resident) // per_row) // SUB * SUB)

    if B <= block_batch:
        # At least 2 grid steps: shards across v7x's two TensorCores and overlaps
        # DMA with compute on all generations.
        TB = _round_up(max(-(-B // 2), SUB), SUB)
    else:
        TB = max(SUB, (block_batch // SUB) * SUB)
    TB = min(TB, tb_cap)
    if TB >= 128:
        TB = (TB // 128) * 128             # 128-multiple tile -> lane-dense divergence
    lane_dense_div = (TB % 128 == 0)

    Bp = _round_up(B, TB)
    if Bp != B:
        xs = jnp.pad(xs, ((0, Bp - B), (0, 0)))    # no garbage partial tiles
    grid = (Bp // TB,)

    vmem_est = resident + TB * per_row
    vmem_limit = int(min(max(2 * vmem_est, 32 << 20), 60 << 20))

    if lane_dense_div:
        div_shape = jax.ShapeDtypeStruct((1, Bp), out_dtype)
        div_spec = pl.BlockSpec((1, TB), lambda i: (0, i))
    else:
        div_shape = jax.ShapeDtypeStruct((Bp, 1), out_dtype)
        div_spec = pl.BlockSpec((TB, 1), lambda i: (i, 0))

    cost = pl.CostEstimate(
        flops=4 * Bp * D * Hp + 2 * Bp * Hp * (1 if lane_dense_div else 0) + 5 * Bp * Hp,
        transcendentals=Bp * Hp,
        bytes_accessed=4 * (2 * Bp * D + Bp) + mm_bytes * 2 * D * Hp + 4 * (3 * Hp + 2 * D),
    )

    kernel = functools.partial(_estimator_kernel, matmul_dtype=matmul_dtype,
                               lane_dense_div=lane_dense_div)

    dxs_p, neg_div_p = pl.pallas_call(
        kernel,
        out_shape=(jax.ShapeDtypeStruct((Bp, D), out_dtype), div_shape),
        grid=grid,
        in_specs=[
            pl.BlockSpec((TB, D), lambda i: (i, 0)),   # xs: streamed, double-buffered
            pl.BlockSpec((D, Hp), lambda i: (0, 0)),   # w1: VMEM-resident
            pl.BlockSpec((1, Hp), lambda i: (0, 0)),   # b1 + t (folded)
            pl.BlockSpec((Hp, D), lambda i: (0, 0)),   # w2: VMEM-resident
            pl.BlockSpec((1, D), lambda i: (0, 0)),    # b2
            pl.BlockSpec((1, Hp), lambda i: (0, 0)),   # c = diag(W2 @ W1)
        ],
        out_specs=(
            pl.BlockSpec((TB, D), lambda i: (i, 0)),
            div_spec,
        ),
        compiler_params=pltpu.CompilerParams(
            dimension_semantics=("parallel",),         # batch steps across TCs
            vmem_limit_bytes=vmem_limit,
        ),
        cost_estimate=cost,
    )(xs, w1, b1t, w2, b2, c)

    dxs = dxs_p[:B] if Bp != B else dxs_p
    if lane_dense_div:
        neg_div = neg_div_p[0, :B][:, None]
    else:
        neg_div = neg_div_p[:B]
    return dxs, neg_div


# --------------------------- pure-JAX reference -----------------------------

def _dynamics_ref(t, x, w1, b1, w2, b2):
    h = x @ w1 + b1[0] + t[0]
    return jnp.tanh(h) @ w2 + b2[0]


def _reference(t, xs, w1, b1, w2, b2):
    dxs = jax.vmap(lambda x: _dynamics_ref(t, x, w1, b1, w2, b2))(xs)
    jac = jax.vmap(jax.jacfwd(lambda x: _dynamics_ref(t, x, w1, b1, w2, b2)))(xs)
    div = jnp.trace(jac, axis1=-2, axis2=-1)
    return dxs, -div.reshape(-1, 1)


if __name__ == "__main__":
    key = jax.random.PRNGKey(0)
    k_x1, k_x2, k_w1, k_b1, k_w2, k_b2 = jax.random.split(key, 6)

    D, H = 32, 64  # system_dim, hidden (small test shapes)
    w1 = jax.random.normal(k_w1, (D, H), dtype=jnp.float32) * 0.1
    b1 = jax.random.normal(k_b1, (1, H), dtype=jnp.float32) * 0.1
    w2 = jax.random.normal(k_w2, (H, D), dtype=jnp.float32) * 0.1
    b2 = jax.random.normal(k_b2, (1, D), dtype=jnp.float32) * 0.1
    t = jnp.array([0.5], dtype=jnp.float32)

    # Case 1: small batch, f32 matmuls -> TB=8, 2-step grid, (TB,1) divergence path.
    B1 = 16
    xs1 = jax.random.normal(k_x1, (B1, D), dtype=jnp.float32)
    dxs1, nd1 = brute_force_estimator(t, xs1, w1, b1, w2, b2, use_bf16_matmul=False)
    jax.block_until_ready((dxs1, nd1))
    dxs1_ref, nd1_ref = _reference(t, xs1, w1, b1, w2, b2)
    assert dxs1.shape == (B1, D) and nd1.shape == (B1, 1)
    np.testing.assert_allclose(np.asarray(dxs1), np.asarray(dxs1_ref), rtol=1e-3, atol=1e-3)
    np.testing.assert_allclose(np.asarray(nd1), np.asarray(nd1_ref), rtol=1e-3, atol=1e-3)

    # Case 2: larger batch, default bf16 MXU operands -> TB=128, lane-dense divergence.
    B2 = 256
    xs2 = jax.random.normal(k_x2, (B2, D), dtype=jnp.float32)
    dxs2, nd2 = brute_force_estimator(t, xs2, w1, b1, w2, b2)
    jax.block_until_ready((dxs2, nd2))
    dxs2_ref, nd2_ref = _reference(t, xs2, w1, b1, w2, b2)
    assert dxs2.shape == (B2, D) and nd2.shape == (B2, 1)
    np.testing.assert_allclose(np.asarray(dxs2), np.asarray(dxs2_ref), rtol=3e-2, atol=3e-2)
    np.testing.assert_allclose(np.asarray(nd2), np.asarray(nd2_ref), rtol=3e-2, atol=3e-2)

    print("KERNEL_OK")
</pallas_src>

<mosaic_0001>
module attributes {stable_mosaic.version = 11 : i64} {
  func.func @_estimator_kernel(%arg0: i32, %arg1: memref<8x32xf32, #tpu.memory_space<vmem>>, %arg2: memref<32x128xf32, #tpu.memory_space<vmem>>, %arg3: memref<1x128xf32, #tpu.memory_space<vmem>>, %arg4: memref<128x32xf32, #tpu.memory_space<vmem>>, %arg5: memref<1x32xf32, #tpu.memory_space<vmem>>, %arg6: memref<1x128xf32, #tpu.memory_space<vmem>>, %arg7: memref<8x32xf32, #tpu.memory_space<vmem>>, %arg8: memref<8x1xf32, #tpu.memory_space<vmem>>) attributes {dimension_semantics = [#tpu.dimension_semantics<parallel>], iteration_bounds = array<i64: 2>, scalar_prefetch = 0 : i64, scratch_operands = 0 : i64, tpu.core_type = #tpu.core_type<tc>, window_params = [{transform_indices = @transform_0, window_bounds = array<i64: 8, 32>}, {pipeline_mode = #tpu.pipeline_mode<synchronous>, transform_indices = @transform_1, window_bounds = array<i64: 32, 128>}, {pipeline_mode = #tpu.pipeline_mode<synchronous>, transform_indices = @transform_2, window_bounds = array<i64: 1, 128>}, {pipeline_mode = #tpu.pipeline_mode<synchronous>, transform_indices = @transform_3, window_bounds = array<i64: 128, 32>}, {pipeline_mode = #tpu.pipeline_mode<synchronous>, transform_indices = @transform_4, window_bounds = array<i64: 1, 32>}, {pipeline_mode = #tpu.pipeline_mode<synchronous>, transform_indices = @transform_5, window_bounds = array<i64: 1, 128>}, {transform_indices = @transform_6, window_bounds = array<i64: 8, 32>}, {transform_indices = @transform_7, window_bounds = array<i64: 8, 1>}]} {
    %c0 = arith.constant 0 : index
    %c0_0 = arith.constant 0 : index
    %0 = vector.load %arg1[%c0, %c0_0] : memref<8x32xf32, #tpu.memory_space<vmem>>, vector<8x32xf32>
    %c0_1 = arith.constant 0 : index
    %c0_2 = arith.constant 0 : index
    %1 = vector.load %arg2[%c0_1, %c0_2] : memref<32x128xf32, #tpu.memory_space<vmem>>, vector<32x128xf32>
    %c0_3 = arith.constant 0 : index
    %c0_4 = arith.constant 0 : index
    %2 = vector.load %arg4[%c0_3, %c0_4] : memref<128x32xf32, #tpu.memory_space<vmem>>, vector<128x32xf32>
    %c0_5 = arith.constant 0 : index
    %c0_6 = arith.constant 0 : index
    %3 = vector.load %arg3[%c0_5, %c0_6] : memref<1x128xf32, #tpu.memory_space<vmem>>, vector<1x128xf32>
    %c0_7 = arith.constant 0 : index
    %c0_8 = arith.constant 0 : index
    %4 = vector.load %arg5[%c0_7, %c0_8] : memref<1x32xf32, #tpu.memory_space<vmem>>, vector<1x32xf32>
    %c0_9 = arith.constant 0 : index
    %c0_10 = arith.constant 0 : index
    %5 = vector.load %arg6[%c0_9, %c0_10] : memref<1x128xf32, #tpu.memory_space<vmem>>, vector<1x128xf32>
    %cst = arith.constant dense<0.000000e+00> : vector<8x128xf32>
    %6 = tpu.matmul %0, %1, %cst {dimension_numbers = #tpu.dot_dimension_numbers<[1], [0], [0], [1], [0, 0, 1, 1], [], []>} : vector<8x32xf32>, vector<32x128xf32>, vector<8x128xf32> -> vector<8x128xf32>
    %7 = vector.broadcast %3 : vector<1x128xf32> to vector<8x128xf32>
    %8 = arith.addf %6, %7 : vector<8x128xf32>
    %9 = math.tanh %8 : vector<8x128xf32>
    %cst_11 = arith.constant dense<0.000000e+00> : vector<8x32xf32>
    %10 = tpu.matmul %9, %2, %cst_11 {dimension_numbers = #tpu.dot_dimension_numbers<[1], [0], [0], [1], [0, 0, 1, 1], [], []>} : vector<8x128xf32>, vector<128x32xf32>, vector<8x32xf32> -> vector<8x32xf32>
    %11 = vector.broadcast %4 : vector<1x32xf32> to vector<8x32xf32>
    %12 = arith.addf %10, %11 : vector<8x32xf32>
    %c0_12 = arith.constant 0 : index
    %c0_13 = arith.constant 0 : index
    %13 = vector.load %arg7[%c0_12, %c0_13] : memref<8x32xf32, #tpu.memory_space<vmem>>, vector<8x32xf32>
    tpu.vector_store %arg7[%c0_12, %c0_13], %12 {strides = array<i32>} : memref<8x32xf32, #tpu.memory_space<vmem>>, vector<8x32xf32>,
    %14 = arith.mulf %9, %9 : vector<8x128xf32>
    %cst_14 = arith.constant 1.000000e+00 : f32
    %15 = vector.broadcast %cst_14 : f32 to vector<8x128xf32>
    %16 = arith.subf %15, %14 : vector<8x128xf32>
    %17 = vector.broadcast %5 : vector<1x128xf32> to vector<8x128xf32>
    %18 = arith.mulf %16, %17 : vector<8x128xf32>
    %cst_15 = arith.constant dense<0.000000e+00> : vector<8xf32>
    %19 = vector.multi_reduction <add>, %18, %cst_15 [1] : vector<8x128xf32> to vector<8xf32>
    %20 = vector.shape_cast %19 : vector<8xf32> to vector<8x1xf32>
    %cst_16 = arith.constant 0.000000e+00 : f32
    %21 = vector.broadcast %cst_16 : f32 to vector<8x1xf32>
    %22 = arith.subf %21, %20 : vector<8x1xf32>
    %c0_17 = arith.constant 0 : index
    %c0_18 = arith.constant 0 : index
    %23 = vector.load %arg8[%c0_17, %c0_18] : memref<8x1xf32, #tpu.memory_space<vmem>>, vector<8x1xf32>
    tpu.vector_store %arg8[%c0_17, %c0_18], %22 {strides = array<i32>} : memref<8x1xf32, #tpu.memory_space<vmem>>, vector<8x1xf32>,
    return
  }
  func.func @transform_0(%arg0: i32) -> (i32, i32) {
    %c0_i32 = arith.constant 0 : i32
    %c0_i32_0 = arith.constant 0 : i32
    return %arg0, %c0_i32 : i32, i32
  }
  func.func @transform_1(%arg0: i32) -> (i32, i32) {
    %c0_i32 = arith.constant 0 : i32
    %c0_i32_0 = arith.constant 0 : i32
    %c0_i32_1 = arith.constant 0 : i32
    return %c0_i32, %c0_i32_0 : i32, i32
  }
  func.func @transform_2(%arg0: i32) -> (i32, i32) {
    %c0_i32 = arith.constant 0 : i32
    %c0_i32_0 = arith.constant 0 : i32
    %c0_i32_1 = arith.constant 0 : i32
    return %c0_i32, %c0_i32_0 : i32, i32
  }
  func.func @transform_3(%arg0: i32) -> (i32, i32) {
    %c0_i32 = arith.constant 0 : i32
    %c0_i32_0 = arith.constant 0 : i32
    %c0_i32_1 = arith.constant 0 : i32
    return %c0_i32, %c0_i32_0 : i32, i32
  }
  func.func @transform_4(%arg0: i32) -> (i32, i32) {
    %c0_i32 = arith.constant 0 : i32
    %c0_i32_0 = arith.constant 0 : i32
    %c0_i32_1 = arith.constant 0 : i32
    return %c0_i32, %c0_i32_0 : i32, i32
  }
  func.func @transform_5(%arg0: i32) -> (i32, i32) {
    %c0_i32 = arith.constant 0 : i32
    %c0_i32_0 = arith.constant 0 : i32
    %c0_i32_1 = arith.constant 0 : i32
    return %c0_i32, %c0_i32_0 : i32, i32
  }
  func.func @transform_6(%arg0: i32) -> (i32, i32) {
    %c0_i32 = arith.constant 0 : i32
    %c0_i32_0 = arith.constant 0 : i32
    return %arg0, %c0_i32 : i32, i32
  }
  func.func @transform_7(%arg0: i32) -> (i32, i32) {
    %c0_i32 = arith.constant 0 : i32
    %c0_i32_0 = arith.constant 0 : i32
    return %arg0, %c0_i32 : i32, i32
  }
}

</mosaic_0001>

<llo_original>
// kernel: tpu_custom_call.1
$region0: #{tpu_custom_call.1}
  #allocation0 [shape = 'u32[]', space=smem, size = 0x4, offset = 0x4, fixed_abs, tag = 'smem constant byte address 0x4 - core index']
  #allocation1 [shape = 'u32[72,128]{1,0:T(1,128)}', space=vmem, size = 0x9000, scoped, tag = 'internal scratch']
  %s0 = inlined_call_operand.vmem [shape: f32[16,32], index: 0, kind: input, shape index: {}]
  %s1 = inlined_call_operand.vmem [shape: f32[32,128], index: 1, kind: input, shape index: {}]
  %s2 = inlined_call_operand.vmem [shape: f32[1,128], index: 2, kind: input, shape index: {}]
  %s3 = inlined_call_operand.vmem [shape: f32[128,32], index: 3, kind: input, shape index: {}]
  %s4 = inlined_call_operand.vmem [shape: f32[1,32], index: 4, kind: input, shape index: {}]
  %s5 = inlined_call_operand.vmem [shape: f32[1,128], index: 5, kind: input, shape index: {}]
  %s6 = inlined_call_operand.hbm [shape: f32[16,32], index: 6, kind: output, shape index: {0}]
  %s7 = inlined_call_operand.vmem [shape: f32[16,1], index: 7, kind: output, shape index: {1}]
  %8 = xla_tuple %s6, %s7
  %s9 = sld [smem:[#allocation0]]
  $region65: #{tpu_custom_call.1} parent=0
    _
  %s11 = ssub.s32 1, %s9
  %s12 = scalar_select 0, %s11, %s9
  $region1: #{tpu_custom_call.1} parent=0
    #allocation2 [shape = 'u8[8192]{0}', space=vmem, size = 0x2000, scoped, tag = 'output window, operand 0']
    #allocation3 [shape = 's32[2]{0}', space=sflag, size = 0x8, scoped, tag = 'scoped memory for tpu_custom_call.1']
    %13 = vsyncpa [#allocation3], 0
    %s14 = scalar_lea.sflag [#allocation3], 1
    %15 = vsyncpa %s14, 0
    loop: start=0, step=1, limit=4
    $region2: #{tpu_custom_call.1} parent=1 // loop_pre_header
      _
    $region3: #{tpu_custom_call.1} parent=1 // loop_header
      %s17 = sphi 0, %s21
      %p18 = scmp.ge.s32.totalorder %s17, 4
      %s27 = sphi 0, %s29
      %s30 = sphi 0, %s27
      %s31 = sphi 0, %s30
      %s47 = sphi 0, %s31
      %s51 = sphi 0, %s51
      %s53 = sphi 0, %s51
      %s54 = sphi 0, %s53
      %s68 = sphi 0, %s54
      %s72 = sphi 0, %s72
      %s74 = sphi 0, %s72
      %s75 = sphi 0, %s74
      %s89 = sphi 0, %s75
      %s93 = sphi 0, %s93
      %s95 = sphi 0, %s93
      %s96 = sphi 0, %s95
      %s110 = sphi 0, %s96
      %s114 = sphi 0, %s114
      %s116 = sphi 0, %s114
      %s117 = sphi 0, %s116
      %s131 = sphi 0, %s117
      %s135 = sphi 0, %s135
      %s137 = sphi 0, %s135
      %s138 = sphi 0, %s137
      %s152 = sphi 0, %s138
      %s158 = sphi 0, %s160
      %s161 = sphi 0, %s158
      %s162 = sphi 0, %s161
      %s178 = sphi 0, %s162
      %s184 = sphi 0, %s186
      %s187 = sphi 0, %s184
      %s188 = sphi 0, %s187
      %s204 = sphi 0, %s188
    $region4: #{tpu_custom_call.1} parent=1 // loop_header_branch
      %20 = sbr.rel (%p18) target = $region8
    $region5: #{tpu_custom_call.1} parent=1 // loop_body
      %s22 = ssub.s32 %s17, 1
      %s23 = ssub.s32 %s17, 2
      %s24 = sadd.s32 %s17, 1
      %s25 = ssub.s32 %s17, %s24
      %p26 = scmp.eq.s32.totalorder %s25, 0
      %s28 = sadd.s32 %s27, 1
      %s29 = scalar_select %p26, %s27, %s28
      %p32 = pneg %p26
      %p33 = scmp.eq.s32.totalorder %s17, 1
      %p34 = por %p32, %p33
      %p35 = scmp.ne.s32.totalorder %s27, %s30
      %p36 = scmp.eq.s32.totalorder %s17, 0
      %p37 = por %p35, %p36
      %p38 = scmp.ne.s32.totalorder %s27, %s30
      %p39 = scmp.eq.s32.totalorder %s22, 1
      %p40 = por %p38, %p39
      %p41 = scmp.ne.s32.totalorder %s30, %s31
      %p42 = scmp.eq.s32.totalorder %s22, 0
      %p43 = por %p41, %p42
      %p44 = scmp.ne.s32.totalorder %s30, %s31
      %p45 = scmp.eq.s32.totalorder %s23, 1
      %p46 = por %p44, %p45
      %p48 = scmp.ne.s32.totalorder %s31, %s47
      %p49 = scmp.eq.s32.totalorder %s23, 0
      %p50 = por %p48, %p49
      %s52 = sadd.s32 %s51, 1
      %p55 = scmp.eq.s32.totalorder %s17, 1
      %p56 = scmp.ne.s32.totalorder %s51, %s53
      %p57 = scmp.eq.s32.totalorder %s17, 0
      %p58 = por %p56, %p57
      %p59 = scmp.ne.s32.totalorder %s51, %s53
      %p60 = scmp.eq.s32.totalorder %s22, 1
      %p61 = por %p59, %p60
      %p62 = scmp.ne.s32.totalorder %s53, %s54
      %p63 = scmp.eq.s32.totalorder %s22, 0
      %p64 = por %p62, %p63
      %p65 = scmp.ne.s32.totalorder %s53, %s54
      %p66 = scmp.eq.s32.totalorder %s23, 1
      %p67 = por %p65, %p66
      %p69 = scmp.ne.s32.totalorder %s54, %s68
      %p70 = scmp.eq.s32.totalorder %s23, 0
      %p71 = por %p69, %p70
      %s73 = sadd.s32 %s72, 1
      %p76 = scmp.eq.s32.totalorder %s17, 1
      %p77 = scmp.ne.s32.totalorder %s72, %s74
      %p78 = scmp.eq.s32.totalorder %s17, 0
      %p79 = por %p77, %p78
      %p80 = scmp.ne.s32.totalorder %s72, %s74
      %p81 = scmp.eq.s32.totalorder %s22, 1
      %p82 = por %p80, %p81
      %p83 = scmp.ne.s32.totalorder %s74, %s75
      %p84 = scmp.eq.s32.totalorder %s22, 0
      %p85 = por %p83, %p84
      %p86 = scmp.ne.s32.totalorder %s74, %s75
      %p87 = scmp.eq.s32.totalorder %s23, 1
      %p88 = por %p86, %p87
      %p90 = scmp.ne.s32.totalorder %s75, %s89
      %p91 = scmp.eq.s32.totalorder %s23, 0
      %p92 = por %p90, %p91
      %s94 = sadd.s32 %s93, 1
      %p97 = scmp.eq.s32.totalorder %s17, 1
      %p98 = scmp.ne.s32.totalorder %s93, %s95
      %p99 = scmp.eq.s32.totalorder %s17, 0
      %p100 = por %p98, %p99
      %p101 = scmp.ne.s32.totalorder %s93, %s95
      %p102 = scmp.eq.s32.totalorder %s22, 1
      %p103 = por %p101, %p102
      %p104 = scmp.ne.s32.totalorder %s95, %s96
      %p105 = scmp.eq.s32.totalorder %s22, 0
      %p106 = por %p104, %p105
      %p107 = scmp.ne.s32.totalorder %s95, %s96
      %p108 = scmp.eq.s32.totalorder %s23, 1
      %p109 = por %p107, %p108
      %p111 = scmp.ne.s32.totalorder %s96, %s110
      %p112 = scmp.eq.s32.totalorder %s23, 0
      %p113 = por %p111, %p112
      %s115 = sadd.s32 %s114, 1
      %p118 = scmp.eq.s32.totalorder %s17, 1
      %p119 = scmp.ne.s32.totalorder %s114, %s116
      %p120 = scmp.eq.s32.totalorder %s17, 0
      %p121 = por %p119, %p120
      %p122 = scmp.ne.s32.totalorder %s114, %s116
      %p123 = scmp.eq.s32.totalorder %s22, 1
      %p124 = por %p122, %p123
      %p125 = scmp.ne.s32.totalorder %s116, %s117
      %p126 = scmp.eq.s32.totalorder %s22, 0
      %p127 = por %p125, %p126
      %p128 = scmp.ne.s32.totalorder %s116, %s117
      %p129 = scmp.eq.s32.totalorder %s23, 1
      %p130 = por %p128, %p129
      %p132 = scmp.ne.s32.totalorder %s117, %s131
      %p133 = scmp.eq.s32.totalorder %s23, 0
      %p134 = por %p132, %p133
      %s136 = sadd.s32 %s135, 1
      %p139 = scmp.eq.s32.totalorder %s17, 1
      %p140 = scmp.ne.s32.totalorder %s135, %s137
      %p141 = scmp.eq.s32.totalorder %s17, 0
      %p142 = por %p140, %p141
      %p143 = scmp.ne.s32.totalorder %s135, %s137
      %p144 = scmp.eq.s32.totalorder %s22, 1
      %p145 = por %p143, %p144
      %p146 = scmp.ne.s32.totalorder %s137, %s138
      %p147 = scmp.eq.s32.totalorder %s22, 0
      %p148 = por %p146, %p147
      %p149 = scmp.ne.s32.totalorder %s137, %s138
      %p150 = scmp.eq.s32.totalorder %s23, 1
      %p151 = por %p149, %p150
      %p153 = scmp.ne.s32.totalorder %s138, %s152
      %p154 = scmp.eq.s32.totalorder %s23, 0
      %p155 = por %p153, %p154
      %s156 = ssub.s32 %s17, %s24
      %p157 = scmp.eq.s32.totalorder %s156, 0
      %s159 = sadd.s32 %s158, 1
      %s160 = scalar_select %p157, %s158, %s159
      %p163 = pneg %p157
      %p164 = scmp.eq.s32.totalorder %s17, 1
      %p165 = por %p163, %p164
      %p166 = scmp.ne.s32.totalorder %s158, %s161
      %p167 = scmp.eq.s32.totalorder %s17, 0
      %p168 = por %p166, %p167
      %p169 = scmp.ne.s32.totalorder %s158, %s161
      %p170 = scmp.eq.s32.totalorder %s22, 1
      %p171 = por %p169, %p170
      %p172 = scmp.ne.s32.totalorder %s161, %s162
      %p173 = scmp.eq.s32.totalorder %s22, 0
      %p174 = por %p172, %p173
      %p175 = scmp.ne.s32.totalorder %s161, %s162
      %p176 = scmp.eq.s32.totalorder %s23, 1
      %p177 = por %p175, %p176
      %p179 = scmp.ne.s32.totalorder %s162, %s178
      %p180 = scmp.eq.s32.totalorder %s23, 0
      %p181 = por %p179, %p180
      %s182 = ssub.s32 %s17, %s24
      %p183 = scmp.eq.s32.totalorder %s182, 0
      %s185 = sadd.s32 %s184, 1
      %s186 = scalar_select %p183, %s184, %s185
      %p189 = pneg %p183
      %p190 = scmp.eq.s32.totalorder %s17, 1
      %p191 = por %p189, %p190
      %p192 = scmp.ne.s32.totalorder %s184, %s187
      %p193 = scmp.eq.s32.totalorder %s17, 0
      %p194 = por %p192, %p193
      %p195 = scmp.ne.s32.totalorder %s184, %s187
      %p196 = scmp.eq.s32.totalorder %s22, 1
      %p197 = por %p195, %p196
      %p198 = scmp.ne.s32.totalorder %s187, %s188
      %p199 = scmp.eq.s32.totalorder %s22, 0
      %p200 = por %p198, %p199
      %p201 = scmp.ne.s32.totalorder %s187, %s188
      %p202 = scmp.eq.s32.totalorder %s23, 1
      %p203 = por %p201, %p202
      %p205 = scmp.ne.s32.totalorder %s188, %s204
      %p206 = scmp.eq.s32.totalorder %s23, 0
      %p207 = por %p205, %p206
      %p208 = scmp.le.s32.totalorder 1, %s17
      %p209 = scmp.lt.s32.totalorder %s17, 3
      %p210 = pnand %p208, %p209
      %p211 = pneg %p210
      // Predicated region
      $region9: #{tpu_custom_call.1} parent=5 // pred_check
        _
      $region10: #{tpu_custom_call.1} parent=5 // pred_check_branch
        %213 = sbr.rel (%p210) target = $region12
      $region11: #{tpu_custom_call.1} parent=5 // pred_region
        %s214 = ssub.s32 %s17, 1
        // Predicated region
        $region13: #{tpu_custom_call.1} parent=11 // pred_check
          %p215 = pneg %p64
        $region14: #{tpu_custom_call.1} parent=11 // pred_check_branch
          %217 = sbr.rel (%p215) target = $region16
        $region15: #{tpu_custom_call.1} parent=11 // pred_region
          _
        $region16: #{tpu_custom_call.1} parent=11 // pred_fallthru
          _
        // Predicated region
        $region17: #{tpu_custom_call.1} parent=11 // pred_check
          %p218 = pneg %p85
        $region18: #{tpu_custom_call.1} parent=11 // pred_check_branch
          %220 = sbr.rel (%p218) target = $region20
        $region19: #{tpu_custom_call.1} parent=11 // pred_region
          _
        $region20: #{tpu_custom_call.1} parent=11 // pred_fallthru
          _
        // Predicated region
        $region21: #{tpu_custom_call.1} parent=11 // pred_check
          %p221 = pneg %p106
        $region22: #{tpu_custom_call.1} parent=11 // pred_check_branch
          %223 = sbr.rel (%p221) target = $region24
        $region23: #{tpu_custom_call.1} parent=11 // pred_region
          _
        $region24: #{tpu_custom_call.1} parent=11 // pred_fallthru
          _
        // Predicated region
        $region25: #{tpu_custom_call.1} parent=11 // pred_check
          %p224 = pneg %p127
        $region26: #{tpu_custom_call.1} parent=11 // pred_check_branch
          %226 = sbr.rel (%p224) target = $region28
        $region27: #{tpu_custom_call.1} parent=11 // pred_region
          _
        $region28: #{tpu_custom_call.1} parent=11 // pred_fallthru
          _
        // Predicated region
        $region29: #{tpu_custom_call.1} parent=11 // pred_check
          %p227 = pneg %p148
        $region30: #{tpu_custom_call.1} parent=11 // pred_check_branch
          %229 = sbr.rel (%p227) target = $region32
        $region31: #{tpu_custom_call.1} parent=11 // pred_region
          _
        $region32: #{tpu_custom_call.1} parent=11 // pred_fallthru
          _
      $region12: #{tpu_custom_call.1} parent=5 // pred_fallthru
        _
      %p230 = scmp.lt.s32.totalorder %s17, 2
      // Predicated region
      $region33: #{tpu_custom_call.1} parent=5 // pred_check
        %p231 = pneg %p230
      $region34: #{tpu_custom_call.1} parent=5 // pred_check_branch
        %233 = sbr.rel (%p231) target = $region36
      $region35: #{tpu_custom_call.1} parent=5 // pred_region
        // Predicated region
        $region37: #{tpu_custom_call.1} parent=35 // pred_check
          %p234 = pneg %p37
        $region38: #{tpu_custom_call.1} parent=35 // pred_check_branch
          %236 = sbr.rel (%p234) target = $region40
        $region39: #{tpu_custom_call.1} parent=35 // pred_region
          %p237 = scmp.lt.s32.totalorder %s17, 1
          %s238 = scalar_select %p237, %s17, 1
          %s239 = smul.addr %s238, 8
          %s240 = scalar_lea.vmem %s0, %s239
        $region40: #{tpu_custom_call.1} parent=35 // pred_fallthru
          _
      $region36: #{tpu_custom_call.1} parent=5 // pred_fallthru
        _
      %p241 = scmp.le.s32.totalorder 1, %s17
      %p242 = scmp.lt.s32.totalorder %s17, 3
      %p243 = pnand %p241, %p242
      %p244 = pneg %p243
      // Predicated region
      $region41: #{tpu_custom_call.1} parent=5 // pred_check
        _
      $region42: #{tpu_custom_call.1} parent=5 // pred_check_branch
        %246 = sbr.rel (%p243) target = $region44
      $region43: #{tpu_custom_call.1} parent=5 // pred_region
        %s247 = ssub.s32 %s17, 1
        %p248 = scmp.lt.s32.totalorder %s22, 1
        %s249 = scalar_select %p248, %s22, 1
        %s250 = smul.addr %s249, 8
        %s251 = scalar_lea.vmem %s0, %s250
        %p252 = pneg %p43
        %p253 = pneg %p40
        %p254 = pneg %p64
        %p255 = pneg %p61
        %p256 = pneg %p85
        %p257 = pneg %p82
        %p258 = pneg %p106
        %p259 = pneg %p103
        %p260 = pneg %p127
        %p261 = pneg %p124
        %p262 = pneg %p148
        %p263 = pneg %p145
        %p264 = pneg %p174
        %p265 = pneg %p171
        %s266 = sand.u32 %s161, 1
        %s267 = scalar_lea.sflag [#allocation3], %s266
        %s268 = sand.u32 %s161, 1
        %s269 = smul.addr %s268, 8
        %s270 = scalar_lea.vmem [#allocation2], %s269
        %p271 = pneg %p200
        %p272 = pneg %p197
        %p273 = scmp.lt.s32.totalorder %s22, 1
        %s274 = scalar_select %p273, %s22, 1
        %s275 = smul.addr %s274, 8
        %s276 = scalar_lea.vmem %s7, %s275
        %p277 = scmp.lt.s32.totalorder %s22, 1
        %s278 = scalar_select %p277, %s22, 1
        %s279 = smul.addr %s278, 8
        %s280 = scalar_lea.vmem %s0, %s279
        %p281 = scmp.lt.s32.totalorder %s22, 1
        %s282 = scalar_select %p281, %s22, 1
        %s283 = smul.addr %s282, 8
        %s284 = scalar_lea.vmem %s7, %s283
        %v285 = vld [vmem:[%s280] sm:$0xff]
        %v286 = vld [vmem:[%s1] sm:$0xff]
        %v287 = vld [vmem:[%s1 + $0x8] sm:$0xff]
        %v288 = vld [vmem:[%s1 + $0x10] sm:$0xff]
        %v289 = vld [vmem:[%s1 + $0x18] sm:$0xff]
        %v290 = vld [vmem:[%s3] sm:$0xff]
        %v291 = vld [vmem:[%s3 + $0x8] sm:$0xff]
        %v292 = vld [vmem:[%s3 + $0x10] sm:$0xff]
        %v293 = vld [vmem:[%s3 + $0x18] sm:$0xff]
        %v294 = vld [vmem:[%s3 + $0x20] sm:$0xff]
        %v295 = vld [vmem:[%s3 + $0x28] sm:$0xff]
        %v296 = vld [vmem:[%s3 + $0x30] sm:$0xff]
        %v297 = vld [vmem:[%s3 + $0x38] sm:$0xff]
        %v298 = vld [vmem:[%s3 + $0x40] sm:$0xff]
        %v299 = vld [vmem:[%s3 + $0x48] sm:$0xff]
        %v300 = vld [vmem:[%s3 + $0x50] sm:$0xff]
        %v301 = vld [vmem:[%s3 + $0x58] sm:$0xff]
        %v302 = vld [vmem:[%s3 + $0x60] sm:$0xff]
        %v303 = vld [vmem:[%s3 + $0x68] sm:$0xff]
        %v304 = vld [vmem:[%s3 + $0x70] sm:$0xff]
        %v305 = vld [vmem:[%s3 + $0x78] sm:$0xff]
        %v306 = vld [vmem:[%s2] sm:$0x1]
        %v307 = vld [vmem:[%s4] sm:$0x1]
        %v308 = vld [vmem:[%s5] sm:$0x1]
        %v310 = vperm.slane %v306, 0
        %vm312 = vcmask 261120
        %v314 = vsel %vm312, %v285, 0
        %316 = vmatpush.msra.mxu0 0.0
        %317 = vmatpush.msra.mxu0 0.0
        %318 = vmatpush.msra.mxu0 0.0
        %319 = vmatpush.msra.mxu0 0.0
        %320 = vmatpush.msra.mxu0 0.0
        %321 = vmatpush.msra.mxu0 0.0
        %322 = vmatpush.msra.mxu0 0.0
        %323 = vmatpush.msra.mxu0 0.0
        %324 = vmatpush.msra.mxu0 0.0
        %325 = vmatpush.msra.mxu0 0.0
        %326 = vmatpush.msra.mxu0 0.0
        %327 = vmatpush.msra.mxu0 0.0
        %328 = vmatpush.msra.mxu0 %v289
        %329 = vmatpush.msra.mxu0 %v288
        %330 = vmatpush.msra.mxu0 %v287
        %331 = vmatpush.msra.mxu0 %v286
        %332 = vmatmul.f32.gmra.mxu0 %v314
        %v333 = vpop.f32.mrf.mxu0
        %v334 = vadd.f32 %v310, %v333
        %335 = vdwg.mxu0
        %v336 = vtanh.pop %v334
        %v338 = vperm.slane %v307, 0
        %340 = vmatpush.msra.mxu0 %v305
        %341 = vmatpush.msra.mxu0 %v304
        %342 = vmatpush.msra.mxu0 %v303
        %343 = vmatpush.msra.mxu0 %v302
        %344 = vmatpush.msra.mxu0 %v301
        %345 = vmatpush.msra.mxu0 %v300
        %346 = vmatpush.msra.mxu0 %v299
        %347 = vmatpush.msra.mxu0 %v298
        %348 = vmatpush.msra.mxu0 %v297
        %349 = vmatpush.msra.mxu0 %v296
        %350 = vmatpush.msra.mxu0 %v295
        %351 = vmatpush.msra.mxu0 %v294
        %352 = vmatpush.msra.mxu0 %v293
        %353 = vmatpush.msra.mxu0 %v292
        %354 = vmatpush.msra.mxu0 %v291
        %355 = vmatpush.msra.mxu0 %v290
        %356 = vmatmul.f32.gmra.mxu0 %v336
        %v357 = vpop.f32.mrf.mxu0
        %v358 = vadd.f32 %v338, %v357
        %359 = vdwg.mxu0
        %360 = vst.msk [vmem:[%s270] sm:$0xff] %vm312, %v358
        %v361 = vmul.f32 %v336, %v336
        %v362 = vsub.f32 1.0, %v361
        %v364 = vperm.slane %v308, 0
        %v366 = vmul.f32 %v362, %v364
        %367 = vadd.xlane.f32.xlu0 %v366
        %v368 = vpop.xlane.xlu0 %367
        %v369 = vsub.f32 0.0, %v368
        %vm370 = vcmask 7168
        %371 = vst.msk [vmem:[%s284] sm:$0xff] %vm370, %v369
        %s372 = sand.u32 %s161, 1
        %s373 = scalar_lea.sflag [#allocation3], %s372
        %s374 = sand.u32 %s161, 1
        %s375 = smul.addr %s374, 8
        %s376 = scalar_lea.vmem [#allocation2], %s375
        %p377 = scmp.lt.s32.totalorder %s22, 1
        %s378 = scalar_select %p377, %s22, 1
        %s379 = smul.addr %s378, 8
        %s380 = scalar_lea.vmem %s7, %s379
        // Predicated region
        $region45: #{tpu_custom_call.1} parent=43 // pred_check
          %p381 = pneg %p171
        $region46: #{tpu_custom_call.1} parent=43 // pred_check_branch
          %383 = sbr.rel (%p381) target = $region48
        $region47: #{tpu_custom_call.1} parent=43 // pred_region
          %385 = vsyncadd %s373, 0
          %s386 = smul.addr %s22, 8
          %s387 = scalar_lea.hbm %s6, %s386
          %s389 = sshll.u32 %s376, 4
          %s390 = int_to_ptr.vmem [resolvable:$true] %s389
          %s391 = sshll.u32 %s387, 4
          %s392 = int_to_ptr.hbm [resolvable:$true] %s391
          %394 = dma.vmem_to_hbm [thread:$0]  %s390, 128, %s392, %s373
        $region48: #{tpu_custom_call.1} parent=43 // pred_fallthru
          _
        // Predicated region
        $region49: #{tpu_custom_call.1} parent=43 // pred_check
          %p395 = pneg %p197
        $region50: #{tpu_custom_call.1} parent=43 // pred_check_branch
          %397 = sbr.rel (%p395) target = $region52
        $region51: #{tpu_custom_call.1} parent=43 // pred_region
          _
        $region52: #{tpu_custom_call.1} parent=43 // pred_fallthru
          _
      $region44: #{tpu_custom_call.1} parent=5 // pred_fallthru
        _
      %p398 = scmp.le.s32.totalorder 2, %s17
      // Predicated region
      $region53: #{tpu_custom_call.1} parent=5 // pred_check
        %p399 = pneg %p398
      $region54: #{tpu_custom_call.1} parent=5 // pred_check_branch
        %401 = sbr.rel (%p399) target = $region56
      $region55: #{tpu_custom_call.1} parent=5 // pred_region
        %s402 = ssub.s32 %s17, 2
        // Predicated region
        $region57: #{tpu_custom_call.1} parent=55 // pred_check
          %p403 = pneg %p177
        $region58: #{tpu_custom_call.1} parent=55 // pred_check_branch
          %405 = sbr.rel (%p403) target = $region60
        $region59: #{tpu_custom_call.1} parent=55 // pred_region
          %s406 = sand.u32 %s162, 1
          %s407 = scalar_lea.sflag [#allocation3], %s406
          %s408 = sand.u32 %s162, 1
          %s409 = smul.addr %s408, 8
          %s410 = scalar_lea.vmem [#allocation2], %s409
          %412 = dma.done %s407, 128
        $region60: #{tpu_custom_call.1} parent=55 // pred_fallthru
          _
        // Predicated region
        $region61: #{tpu_custom_call.1} parent=55 // pred_check
          %p413 = pneg %p203
        $region62: #{tpu_custom_call.1} parent=55 // pred_check_branch
          %415 = sbr.rel (%p413) target = $region64
        $region63: #{tpu_custom_call.1} parent=55 // pred_region
          %p416 = scmp.lt.s32.totalorder %s23, 1
          %s417 = scalar_select %p416, %s23, 1
          %s418 = smul.addr %s417, 8
          %s419 = scalar_lea.vmem %s7, %s418
        $region64: #{tpu_custom_call.1} parent=55 // pred_fallthru
          _
      $region56: #{tpu_custom_call.1} parent=5 // pred_fallthru
        _
    $region6: #{tpu_custom_call.1} parent=1 // loop_footer
      %s21 = sadd.s32 1, %s17
    $region7: #{tpu_custom_call.1} parent=1 // loop_footer_branch
      %16 = sbr.rel target = $region3
    $region8: #{tpu_custom_call.1} parent=1 // loop_exit
      _
    %420 = vsyncpa [#allocation3], 1
    %s421 = scalar_lea.sflag [#allocation3], 1
    %422 = vsyncpa %s421, 1

</llo_original>
